<compile_context>
chip_gen: v7x
topology: tpu7x:2x2x1
jax: 0.10.0
libtpu: 0.0.40
codegen_flags: <defaults>
</compile_context>

<pallas_src>
import math

import jax
import jax.numpy as jnp
from jax.experimental import pallas as pl
from jax.experimental.pallas import tpu as pltpu


def _round_up(n, m):
    return ((n + m - 1) // m) * m


def _tpu_info():
    """Returns (vmem_capacity_bytes, num_tensorcores) with safe fallbacks."""
    try:
        info = pltpu.get_tpu_info()
        vmem_cap = int(info.vmem_capacity_bytes)
    except Exception:
        # Conservative fallback (v7x-sized VMEM) if the query is unavailable.
        vmem_cap = 64 << 20
    # v7x exposes 64 MiB VMEM per TensorCore and has 2 TCs/chip; v5e/v6e: 128 MiB / 1 TC.
    num_tc = 2 if vmem_cap <= (64 << 20) else 1
    return vmem_cap, num_tc


def _make_lora_kernel(scale, chunked):
    if not chunked:
        def kernel(x_ref, down_ref, up_ref, o_ref):
            # Down-projection, f32 accumulation on the MXU.
            h = jnp.dot(x_ref[...], down_ref[...],
                        preferred_element_type=jnp.float32)
            # Cast the small (tm, rank) intermediate to the weight dtype so the
            # up-projection is a single-pass bf16 matmul for bf16 models
            # (no-op for f32); accumulation stays f32.
            h = h.astype(up_ref.dtype)
            y = jnp.dot(h, up_ref[...], preferred_element_type=jnp.float32)
            # Scale on the f32 accumulator (free VPU slot in this HBM-bound kernel).
            o_ref[...] = (y * scale).astype(o_ref.dtype)
        return kernel

    def kernel(x_ref, down_ref, up_ref, o_ref, h_ref):
        # Out-dim-chunked variant: grid = (row tiles, out chunks).  The tiny
        # (tm, rank) down-projection is computed once per row tile (j == 0)
        # and reused from VMEM scratch for every out chunk.
        @pl.when(pl.program_id(1) == 0)
        def _():
            h = jnp.dot(x_ref[...], down_ref[...],
                        preferred_element_type=jnp.float32)
            h_ref[...] = h.astype(h_ref.dtype)

        y = jnp.dot(h_ref[...], up_ref[...], preferred_element_type=jnp.float32)
        o_ref[...] = (y * scale).astype(o_ref.dtype)
    return kernel


def lora_forward(x, down, up, *, tm=None, tn=None, vmem_budget_bytes=None):
    """LoRA forward: y = ((x @ down) @ up) * (1 / bottle_dim)."""
    in_dim, bottle_dim = down.shape
    bd2, out_dim = up.shape
    assert bd2 == bottle_dim
    assert x.shape[-1] == in_dim

    scale = 1.0 / float(bottle_dim)
    out_dtype = x.dtype

    # Flatten leading dims to rows (pure metadata reshape, no copy).
    lead_shape = x.shape[:-1]
    M = 1
    for d in lead_shape:
        M *= d
    x2d = x.reshape(M, in_dim)

    vmem_cap, num_tc = _tpu_info()
    if vmem_budget_bytes is None:
        # ~0.8 of physical VMEM; ~100 MiB on v5e/v6e, ~51 MiB on v7x
        # (headroom for Mosaic internal scratch / MXU result staging).
        vmem_budget_bytes = min(vmem_cap * 4 // 5, 100 << 20)

    x_bytes = jnp.dtype(x.dtype).itemsize
    w_bytes = jnp.dtype(down.dtype).itemsize
    o_bytes = jnp.dtype(out_dtype).itemsize
    # Minimum sublane multiple per dtype: 8 (f32), 16 (bf16), 32 (int8).
    sublane = max(8, 32 // x_bytes)

    def vmem_estimate(t, n):
        chunked = n < out_dim
        est = 2 * t * in_dim * x_bytes            # x row tiles (double-buffered)
        est += 2 * t * n * o_bytes                # out tiles (double-buffered)
        est += in_dim * bottle_dim * w_bytes      # resident down (single-buffered)
        if chunked:
            est += 2 * bottle_dim * n * w_bytes   # up column chunks (double-buffered)
            est += t * bottle_dim * w_bytes       # h scratch (weight dtype)
        else:
            est += bottle_dim * n * w_bytes       # resident up (single-buffered)
        est += t * n * 4 + t * bottle_dim * 4     # f32 matmul results / temporaries
        return est

    if tm is None:
        # Big row tiles amortize the ~0.35us per-grid-step overhead; the kernel
        # is HBM-bound so tile size is the main lever.
        tm = 512
        if M < num_tc * tm:
            # Small (decode-style) problem: one sublane-aligned grid step per
            # TensorCore.  On v5e/v6e (1 TC) that is a single step.
            tm = max(sublane, _round_up(pl.cdiv(M, num_tc), sublane))

    if tn is None:
        tn = out_dim
        # If the resident-out layout would blow VMEM, chunk the up-projection /
        # output along out_dim (multiples of 128) rather than shrinking tm.
        while tn > 128 and vmem_estimate(tm, tn) > vmem_budget_bytes:
            tn = max(128, _round_up(pl.cdiv(tn, 2), 128))
    # Last resort: shrink the row tile.
    while tm > 2 * sublane and vmem_estimate(tm, tn) > vmem_budget_bytes:
        tm = max(sublane, _round_up(pl.cdiv(tm, 2), sublane))

    chunked = tn < out_dim
    kernel = _make_lora_kernel(scale, chunked)

    vmem_limit = int(max(16 << 20,
                         min(vmem_budget_bytes,
                             vmem_estimate(tm, tn) * 5 // 4 + (2 << 20))))

    if not chunked:
        grid = (pl.cdiv(M, tm),)
        in_specs = [
            pl.BlockSpec((tm, in_dim), lambda i: (i, 0)),
            # Weights are block-invariant and fully resident -> single buffer.
            pl.BlockSpec((in_dim, bottle_dim), lambda i: (0, 0),
                         pipeline_mode=pl.Buffered(1)),
            pl.BlockSpec((bottle_dim, out_dim), lambda i: (0, 0),
                         pipeline_mode=pl.Buffered(1)),
        ]
        out_specs = pl.BlockSpec((tm, out_dim), lambda i: (i, 0))
        scratch_shapes = []
        dims = ("parallel",)
    else:
        grid = (pl.cdiv(M, tm), pl.cdiv(out_dim, tn))
        in_specs = [
            # x block index is constant across the out-chunk axis -> fetched once.
            pl.BlockSpec((tm, in_dim), lambda i, j: (i, 0)),
            pl.BlockSpec((in_dim, bottle_dim), lambda i, j: (0, 0),
                         pipeline_mode=pl.Buffered(1)),
            pl.BlockSpec((bottle_dim, tn), lambda i, j: (0, j)),
        ]
        out_specs = pl.BlockSpec((tm, tn), lambda i, j: (i, j))
        scratch_shapes = [pltpu.VMEM((tm, bottle_dim), up.dtype)]
        # The h scratch carries state across the out-chunk axis -> "arbitrary".
        dims = ("parallel", "arbitrary")

    out2d = pl.pallas_call(
        kernel,
        out_shape=jax.ShapeDtypeStruct((M, out_dim), out_dtype),
        grid_spec=pltpu.PrefetchScalarGridSpec(
            num_scalar_prefetch=0,
            grid=grid,
            in_specs=in_specs,
            out_specs=out_specs,
            scratch_shapes=scratch_shapes,
        ),
        compiler_params=pltpu.CompilerParams(
            dimension_semantics=dims,
            vmem_limit_bytes=vmem_limit,
        ),
    )(x2d, down, up)

    return out2d.reshape(*lead_shape, out_dim)


if __name__ == "__main__":
    # Small shapes consistent with the module: batch=2, seq=8, in_dim=32,
    # bottle_dim=8, out_dim=32.
    B, S, IN_DIM, BOTTLE, OUT_DIM = 2, 8, 32, 8, 32

    key = jax.random.PRNGKey(0)
    kx, kdown, kup, kx2, kup2 = jax.random.split(key, 5)

    x = jax.random.normal(kx, (B, S, IN_DIM), dtype=jnp.float32)

    # down: kaiming_uniform_(a=sqrt(5)) over [in_dim, bottle_dim]
    bound = math.sqrt(1.0 / BOTTLE)
    down = jax.random.uniform(kdown, (IN_DIM, BOTTLE), dtype=jnp.float32,
                              minval=-bound, maxval=bound)
    # The module inits `up` to zeros (forward would be identically zero); use
    # small random values so the kernel path is actually exercised.
    up = 0.02 * jax.random.normal(kup, (BOTTLE, OUT_DIM), dtype=jnp.float32)

    scale = 1.0 / BOTTLE

    # --- f32 ----------------------------------------------------------------
    out = jax.block_until_ready(lora_forward(x, down, up))
    ref = (x @ down) @ up * scale
    assert out.shape == (B, S, OUT_DIM)
    assert jnp.allclose(out, ref, atol=1e-5, rtol=1e-5)

    # --- f32, row count NOT sublane/tile aligned (partial last row block) ---
    x_odd = jax.random.normal(kx2, (3, 7, IN_DIM), dtype=jnp.float32)
    out_odd = jax.block_until_ready(lora_forward(x_odd, down, up))
    ref_odd = (x_odd @ down) @ up * scale
    assert out_odd.shape == (3, 7, OUT_DIM)
    assert jnp.allclose(out_odd, ref_odd, atol=1e-5, rtol=1e-5)

    # --- bf16 path (exercises the in-kernel cast of the intermediate) -------
    xb = x.astype(jnp.bfloat16)
    db = down.astype(jnp.bfloat16)
    ub = up.astype(jnp.bfloat16)
    out_bf = jax.block_until_ready(lora_forward(xb, db, ub))
    ref_bf = ((xb.astype(jnp.float32) @ db.astype(jnp.float32))
              @ ub.astype(jnp.float32)) * scale
    assert out_bf.shape == (B, S, OUT_DIM)
    assert jnp.allclose(out_bf.astype(jnp.float32), ref_bf, atol=2e-2, rtol=5e-2)

    # --- forced out-dim chunking (second grid axis + h scratch reuse) -------
    OUT2 = 256
    up2 = 0.02 * jax.random.normal(kup2, (BOTTLE, OUT2), dtype=jnp.float32)
    out_ch = jax.block_until_ready(lora_forward(x, down, up2, tn=128))
    ref_ch = (x @ down) @ up2 * scale
    assert out_ch.shape == (B, S, OUT2)
    assert jnp.allclose(out_ch, ref_ch, atol=1e-5, rtol=1e-5)

    print("KERNEL_OK")
</pallas_src>

<mosaic_0001>
module attributes {stable_mosaic.version = 11 : i64} {
  func.func @kernel(%arg0: i32, %arg1: memref<8x32xf32, #tpu.memory_space<vmem>>, %arg2: memref<32x8xf32, #tpu.memory_space<vmem>>, %arg3: memref<8x32xf32, #tpu.memory_space<vmem>>, %arg4: memref<8x32xf32, #tpu.memory_space<vmem>>) attributes {dimension_semantics = [#tpu.dimension_semantics<parallel>], iteration_bounds = array<i64: 2>, scalar_prefetch = 0 : i64, scratch_operands = 0 : i64, tpu.core_type = #tpu.core_type<tc>, window_params = [{transform_indices = @transform_0, window_bounds = array<i64: 8, 32>}, {pipeline_mode = #tpu.pipeline_mode<synchronous>, transform_indices = @transform_1, window_bounds = array<i64: 32, 8>}, {pipeline_mode = #tpu.pipeline_mode<synchronous>, transform_indices = @transform_2, window_bounds = array<i64: 8, 32>}, {transform_indices = @transform_3, window_bounds = array<i64: 8, 32>}]} {
    %c0 = arith.constant 0 : index
    %c0_0 = arith.constant 0 : index
    %0 = vector.load %arg1[%c0, %c0_0] : memref<8x32xf32, #tpu.memory_space<vmem>>, vector<8x32xf32>
    %c0_1 = arith.constant 0 : index
    %c0_2 = arith.constant 0 : index
    %1 = vector.load %arg2[%c0_1, %c0_2] : memref<32x8xf32, #tpu.memory_space<vmem>>, vector<32x8xf32>
    %cst = arith.constant dense<0.000000e+00> : vector<8x8xf32>
    %2 = tpu.matmul %0, %1, %cst {dimension_numbers = #tpu.dot_dimension_numbers<[1], [0], [0], [1], [0, 0, 1, 1], [], []>} : vector<8x32xf32>, vector<32x8xf32>, vector<8x8xf32> -> vector<8x8xf32>
    %c0_3 = arith.constant 0 : index
    %c0_4 = arith.constant 0 : index
    %3 = vector.load %arg3[%c0_3, %c0_4] : memref<8x32xf32, #tpu.memory_space<vmem>>, vector<8x32xf32>
    %cst_5 = arith.constant dense<0.000000e+00> : vector<8x32xf32>
    %4 = tpu.matmul %2, %3, %cst_5 {dimension_numbers = #tpu.dot_dimension_numbers<[1], [0], [0], [1], [0, 0, 1, 1], [], []>} : vector<8x8xf32>, vector<8x32xf32>, vector<8x32xf32> -> vector<8x32xf32>
    %cst_6 = arith.constant 1.250000e-01 : f32
    %5 = vector.broadcast %cst_6 : f32 to vector<8x32xf32>
    %6 = arith.mulf %4, %5 : vector<8x32xf32>
    %c0_7 = arith.constant 0 : index
    %c0_8 = arith.constant 0 : index
    %7 = vector.load %arg4[%c0_7, %c0_8] : memref<8x32xf32, #tpu.memory_space<vmem>>, vector<8x32xf32>
    tpu.vector_store %arg4[%c0_7, %c0_8], %6 {strides = array<i32>} : memref<8x32xf32, #tpu.memory_space<vmem>>, vector<8x32xf32>,
    return
  }
  func.func @transform_0(%arg0: i32) -> (i32, i32) {
    %c0_i32 = arith.constant 0 : i32
    %c0_i32_0 = arith.constant 0 : i32
    return %arg0, %c0_i32 : i32, i32
  }
  func.func @transform_1(%arg0: i32) -> (i32, i32) {
    %c0_i32 = arith.constant 0 : i32
    %c0_i32_0 = arith.constant 0 : i32
    %c0_i32_1 = arith.constant 0 : i32
    return %c0_i32, %c0_i32_0 : i32, i32
  }
  func.func @transform_2(%arg0: i32) -> (i32, i32) {
    %c0_i32 = arith.constant 0 : i32
    %c0_i32_0 = arith.constant 0 : i32
    %c0_i32_1 = arith.constant 0 : i32
    return %c0_i32, %c0_i32_0 : i32, i32
  }
  func.func @transform_3(%arg0: i32) -> (i32, i32) {
    %c0_i32 = arith.constant 0 : i32
    %c0_i32_0 = arith.constant 0 : i32
    return %arg0, %c0_i32 : i32, i32
  }
}

</mosaic_0001>

<llo_original>
// kernel: tpu_custom_call.1
$region0: #{tpu_custom_call.1}
  #allocation0 [shape = 'u32[]', space=smem, size = 0x4, offset = 0x4, fixed_abs, tag = 'smem constant byte address 0x4 - core index']
  #allocation1 [shape = 'u32[144,128]{1,0:T(1,128)}', space=vmem, size = 0x12000, scoped, tag = 'internal scratch']
  %s0 = inlined_call_operand.vmem [shape: f32[16,32], index: 0, kind: input, shape index: {}]
  %s1 = inlined_call_operand.vmem [shape: f32[32,8], index: 1, kind: input, shape index: {}]
  %s2 = inlined_call_operand.vmem [shape: f32[8,32], index: 2, kind: input, shape index: {}]
  %s3 = inlined_call_operand.hbm [shape: f32[16,32], index: 3, kind: output, shape index: {}]
  %s4 = sld [smem:[#allocation0]]
  $region45: #{tpu_custom_call.1} parent=0
    _
  %s6 = ssub.s32 1, %s4
  %s7 = scalar_select 0, %s6, %s4
  $region1: #{tpu_custom_call.1} parent=0
    #allocation2 [shape = 'u8[8192]{0}', space=vmem, size = 0x2000, scoped, tag = 'output window, operand 0']
    #allocation3 [shape = 's32[2]{0}', space=sflag, size = 0x8, scoped, tag = 'scoped memory for tpu_custom_call.1']
    %8 = vsyncpa [#allocation3], 0
    %s9 = scalar_lea.sflag [#allocation3], 1
    %10 = vsyncpa %s9, 0
    loop: start=0, step=1, limit=4
    $region2: #{tpu_custom_call.1} parent=1 // loop_pre_header
      _
    $region3: #{tpu_custom_call.1} parent=1 // loop_header
      %s12 = sphi 0, %s16
      %p13 = scmp.ge.s32.totalorder %s12, 4
      %s22 = sphi 0, %s24
      %s25 = sphi 0, %s22
      %s26 = sphi 0, %s25
      %s42 = sphi 0, %s26
      %s46 = sphi 0, %s46
      %s48 = sphi 0, %s46
      %s49 = sphi 0, %s48
      %s63 = sphi 0, %s49
      %s67 = sphi 0, %s67
      %s69 = sphi 0, %s67
      %s70 = sphi 0, %s69
      %s84 = sphi 0, %s70
      %s90 = sphi 0, %s92
      %s93 = sphi 0, %s90
      %s94 = sphi 0, %s93
      %s110 = sphi 0, %s94
    $region4: #{tpu_custom_call.1} parent=1 // loop_header_branch
      %15 = sbr.rel (%p13) target = $region8
    $region5: #{tpu_custom_call.1} parent=1 // loop_body
      %s17 = ssub.s32 %s12, 1
      %s18 = ssub.s32 %s12, 2
      %s19 = sadd.s32 %s12, 1
      %s20 = ssub.s32 %s12, %s19
      %p21 = scmp.eq.s32.totalorder %s20, 0
      %s23 = sadd.s32 %s22, 1
      %s24 = scalar_select %p21, %s22, %s23
      %p27 = pneg %p21
      %p28 = scmp.eq.s32.totalorder %s12, 1
      %p29 = por %p27, %p28
      %p30 = scmp.ne.s32.totalorder %s22, %s25
      %p31 = scmp.eq.s32.totalorder %s12, 0
      %p32 = por %p30, %p31
      %p33 = scmp.ne.s32.totalorder %s22, %s25
      %p34 = scmp.eq.s32.totalorder %s17, 1
      %p35 = por %p33, %p34
      %p36 = scmp.ne.s32.totalorder %s25, %s26
      %p37 = scmp.eq.s32.totalorder %s17, 0
      %p38 = por %p36, %p37
      %p39 = scmp.ne.s32.totalorder %s25, %s26
      %p40 = scmp.eq.s32.totalorder %s18, 1
      %p41 = por %p39, %p40
      %p43 = scmp.ne.s32.totalorder %s26, %s42
      %p44 = scmp.eq.s32.totalorder %s18, 0
      %p45 = por %p43, %p44
      %s47 = sadd.s32 %s46, 1
      %p50 = scmp.eq.s32.totalorder %s12, 1
      %p51 = scmp.ne.s32.totalorder %s46, %s48
      %p52 = scmp.eq.s32.totalorder %s12, 0
      %p53 = por %p51, %p52
      %p54 = scmp.ne.s32.totalorder %s46, %s48
      %p55 = scmp.eq.s32.totalorder %s17, 1
      %p56 = por %p54, %p55
      %p57 = scmp.ne.s32.totalorder %s48, %s49
      %p58 = scmp.eq.s32.totalorder %s17, 0
      %p59 = por %p57, %p58
      %p60 = scmp.ne.s32.totalorder %s48, %s49
      %p61 = scmp.eq.s32.totalorder %s18, 1
      %p62 = por %p60, %p61
      %p64 = scmp.ne.s32.totalorder %s49, %s63
      %p65 = scmp.eq.s32.totalorder %s18, 0
      %p66 = por %p64, %p65
      %s68 = sadd.s32 %s67, 1
      %p71 = scmp.eq.s32.totalorder %s12, 1
      %p72 = scmp.ne.s32.totalorder %s67, %s69
      %p73 = scmp.eq.s32.totalorder %s12, 0
      %p74 = por %p72, %p73
      %p75 = scmp.ne.s32.totalorder %s67, %s69
      %p76 = scmp.eq.s32.totalorder %s17, 1
      %p77 = por %p75, %p76
      %p78 = scmp.ne.s32.totalorder %s69, %s70
      %p79 = scmp.eq.s32.totalorder %s17, 0
      %p80 = por %p78, %p79
      %p81 = scmp.ne.s32.totalorder %s69, %s70
      %p82 = scmp.eq.s32.totalorder %s18, 1
      %p83 = por %p81, %p82
      %p85 = scmp.ne.s32.totalorder %s70, %s84
      %p86 = scmp.eq.s32.totalorder %s18, 0
      %p87 = por %p85, %p86
      %s88 = ssub.s32 %s12, %s19
      %p89 = scmp.eq.s32.totalorder %s88, 0
      %s91 = sadd.s32 %s90, 1
      %s92 = scalar_select %p89, %s90, %s91
      %p95 = pneg %p89
      %p96 = scmp.eq.s32.totalorder %s12, 1
      %p97 = por %p95, %p96
      %p98 = scmp.ne.s32.totalorder %s90, %s93
      %p99 = scmp.eq.s32.totalorder %s12, 0
      %p100 = por %p98, %p99
      %p101 = scmp.ne.s32.totalorder %s90, %s93
      %p102 = scmp.eq.s32.totalorder %s17, 1
      %p103 = por %p101, %p102
      %p104 = scmp.ne.s32.totalorder %s93, %s94
      %p105 = scmp.eq.s32.totalorder %s17, 0
      %p106 = por %p104, %p105
      %p107 = scmp.ne.s32.totalorder %s93, %s94
      %p108 = scmp.eq.s32.totalorder %s18, 1
      %p109 = por %p107, %p108
      %p111 = scmp.ne.s32.totalorder %s94, %s110
      %p112 = scmp.eq.s32.totalorder %s18, 0
      %p113 = por %p111, %p112
      %p114 = scmp.le.s32.totalorder 1, %s12
      %p115 = scmp.lt.s32.totalorder %s12, 3
      %p116 = pnand %p114, %p115
      %p117 = pneg %p116
      // Predicated region
      $region9: #{tpu_custom_call.1} parent=5 // pred_check
        _
      $region10: #{tpu_custom_call.1} parent=5 // pred_check_branch
        %119 = sbr.rel (%p116) target = $region12
      $region11: #{tpu_custom_call.1} parent=5 // pred_region
        %s120 = ssub.s32 %s12, 1
        // Predicated region
        $region13: #{tpu_custom_call.1} parent=11 // pred_check
          %p121 = pneg %p59
        $region14: #{tpu_custom_call.1} parent=11 // pred_check_branch
          %123 = sbr.rel (%p121) target = $region16
        $region15: #{tpu_custom_call.1} parent=11 // pred_region
          _
        $region16: #{tpu_custom_call.1} parent=11 // pred_fallthru
          _
        // Predicated region
        $region17: #{tpu_custom_call.1} parent=11 // pred_check
          %p124 = pneg %p80
        $region18: #{tpu_custom_call.1} parent=11 // pred_check_branch
          %126 = sbr.rel (%p124) target = $region20
        $region19: #{tpu_custom_call.1} parent=11 // pred_region
          _
        $region20: #{tpu_custom_call.1} parent=11 // pred_fallthru
          _
      $region12: #{tpu_custom_call.1} parent=5 // pred_fallthru
        _
      %p127 = scmp.lt.s32.totalorder %s12, 2
      // Predicated region
      $region21: #{tpu_custom_call.1} parent=5 // pred_check
        %p128 = pneg %p127
      $region22: #{tpu_custom_call.1} parent=5 // pred_check_branch
        %130 = sbr.rel (%p128) target = $region24
      $region23: #{tpu_custom_call.1} parent=5 // pred_region
        // Predicated region
        $region25: #{tpu_custom_call.1} parent=23 // pred_check
          %p131 = pneg %p32
        $region26: #{tpu_custom_call.1} parent=23 // pred_check_branch
          %133 = sbr.rel (%p131) target = $region28
        $region27: #{tpu_custom_call.1} parent=23 // pred_region
          %p134 = scmp.lt.s32.totalorder %s12, 1
          %s135 = scalar_select %p134, %s12, 1
          %s136 = smul.addr %s135, 8
          %s137 = scalar_lea.vmem %s0, %s136
        $region28: #{tpu_custom_call.1} parent=23 // pred_fallthru
          _
      $region24: #{tpu_custom_call.1} parent=5 // pred_fallthru
        _
      %p138 = scmp.le.s32.totalorder 1, %s12
      %p139 = scmp.lt.s32.totalorder %s12, 3
      %p140 = pnand %p138, %p139
      %p141 = pneg %p140
      // Predicated region
      $region29: #{tpu_custom_call.1} parent=5 // pred_check
        _
      $region30: #{tpu_custom_call.1} parent=5 // pred_check_branch
        %143 = sbr.rel (%p140) target = $region32
      $region31: #{tpu_custom_call.1} parent=5 // pred_region
        %s144 = ssub.s32 %s12, 1
        %p145 = scmp.lt.s32.totalorder %s17, 1
        %s146 = scalar_select %p145, %s17, 1
        %s147 = smul.addr %s146, 8
        %s148 = scalar_lea.vmem %s0, %s147
        %p149 = pneg %p38
        %p150 = pneg %p35
        %p151 = pneg %p59
        %p152 = pneg %p56
        %p153 = pneg %p80
        %p154 = pneg %p77
        %p155 = pneg %p106
        %p156 = pneg %p103
        %s157 = sand.u32 %s93, 1
        %s158 = scalar_lea.sflag [#allocation3], %s157
        %s159 = sand.u32 %s93, 1
        %s160 = smul.addr %s159, 8
        %s161 = scalar_lea.vmem [#allocation2], %s160
        %p162 = scmp.lt.s32.totalorder %s17, 1
        %s163 = scalar_select %p162, %s17, 1
        %s164 = smul.addr %s163, 8
        %s165 = scalar_lea.vmem %s0, %s164
        %v166 = vld [vmem:[%s165] sm:$0xff]
        %v167 = vld [vmem:[%s1] sm:$0xff]
        %v168 = vld [vmem:[%s1 + $0x8] sm:$0xff]
        %v169 = vld [vmem:[%s1 + $0x10] sm:$0xff]
        %v170 = vld [vmem:[%s1 + $0x18] sm:$0xff]
        %vm171 = vcmask 261120
        %v173 = vsel %vm171, %v166, 0
        %175 = vmatprep.subr.mxu0 0.0
        %176 = vmatpush1.msra.mxu0 %v167
        %177 = vmatprep.subr.mxu0 0.0
        %178 = vmatpush1.msra.mxu0 %v168
        %179 = vmatprep.subr.mxu0 0.0
        %180 = vmatpush1.msra.mxu0 %v169
        %181 = vmatprep.subr.mxu0 0.0
        %182 = vmatpush1.msra.mxu0 %v170
        %183 = vmatprep.subr.mxu0 0.0
        %184 = vmatpush1.msra.mxu0 0.0
        %185 = vmatprep.subr.mxu0 0.0
        %186 = vmatpush1.msra.mxu0 0.0
        %187 = vmatprep.subr.mxu0 0.0
        %188 = vmatpush1.msra.mxu0 0.0
        %189 = vmatprep.subr.mxu0 0.0
        %190 = vmatpush1.msra.mxu0 0.0
        %191 = vmatprep.subr.mxu0 0.0
        %192 = vmatpush1.msra.mxu0 0.0
        %193 = vmatprep.subr.mxu0 0.0
        %194 = vmatpush1.msra.mxu0 0.0
        %195 = vmatprep.subr.mxu0 0.0
        %196 = vmatpush1.msra.mxu0 0.0
        %197 = vmatprep.subr.mxu0 0.0
        %198 = vmatpush1.msra.mxu0 0.0
        %199 = vmatprep.subr.mxu0 0.0
        %200 = vmatpush1.msra.mxu0 0.0
        %201 = vmatprep.subr.mxu0 0.0
        %202 = vmatpush1.msra.mxu0 0.0
        %203 = vmatprep.subr.mxu0 0.0
        %204 = vmatpush1.msra.mxu0 0.0
        %205 = vmatprep.subr.mxu0 0.0
        %206 = vmatpush1.msra.mxu0 0.0
        %207 = vmatprep.subr.mxu0 0.0
        %208 = vmatpush1.msra.mxu0 0.0
        %209 = vmatprep.subr.mxu0 0.0
        %210 = vmatpush1.msra.mxu0 0.0
        %211 = vmatprep.subr.mxu0 0.0
        %212 = vmatpush1.msra.mxu0 0.0
        %213 = vmatprep.subr.mxu0 0.0
        %214 = vmatpush1.msra.mxu0 0.0
        %215 = vmatprep.subr.mxu0 0.0
        %216 = vmatpush1.msra.mxu0 0.0
        %217 = vmatprep.subr.mxu0 0.0
        %218 = vmatpush1.msra.mxu0 0.0
        %219 = vmatprep.subr.mxu0 0.0
        %220 = vmatpush1.msra.mxu0 0.0
        %221 = vmatprep.subr.mxu0 0.0
        %222 = vmatpush1.msra.mxu0 0.0
        %223 = vmatprep.subr.mxu0 0.0
        %224 = vmatpush1.msra.mxu0 0.0
        %225 = vmatprep.subr.mxu0 0.0
        %226 = vmatpush1.msra.mxu0 0.0
        %227 = vmatprep.subr.mxu0 0.0
        %228 = vmatpush1.msra.mxu0 0.0
        %229 = vmatprep.subr.mxu0 0.0
        %230 = vmatpush1.msra.mxu0 0.0
        %231 = vmatprep.subr.mxu0 0.0
        %232 = vmatpush1.msra.mxu0 0.0
        %233 = vmatprep.subr.mxu0 0.0
        %234 = vmatpush1.msra.mxu0 0.0
        %235 = vmatprep.subr.mxu0 0.0
        %236 = vmatpush1.msra.mxu0 0.0
        %237 = vmatprep.subr.mxu0 0.0
        %238 = vmatpush1.msra.mxu0 0.0
        %239 = vmatprep.mubr.f32.mxu0 0.0
        %240 = vmatmul.mubr.f32.gmra.mrb[0].mxu0 %v173
        %v241 = vpop.f32.mrb[0].mxu0
        %v242 = vadd.f32 0.0, %v241
        %v243 = vpop.f32.mrb[0].mxu0
        %244 = vdwg.mxu0
        %v245 = vld [vmem:[%s2] sm:$0xff]
        %vm246 = vcmask 64512
        %v248 = vsel %vm246, %v242, 0
        %250 = vmatprep.subr.mxu0 0.0
        %251 = vmatpush1.msra.mxu0 %v245
        %252 = vmatprep.subr.mxu0 0.0
        %253 = vmatpush1.msra.mxu0 0.0
        %254 = vmatprep.subr.mxu0 0.0
        %255 = vmatpush1.msra.mxu0 0.0
        %256 = vmatprep.subr.mxu0 0.0
        %257 = vmatpush1.msra.mxu0 0.0
        %258 = vmatprep.subr.mxu0 0.0
        %259 = vmatpush1.msra.mxu0 0.0
        %260 = vmatprep.subr.mxu0 0.0
        %261 = vmatpush1.msra.mxu0 0.0
        %262 = vmatprep.subr.mxu0 0.0
        %263 = vmatpush1.msra.mxu0 0.0
        %264 = vmatprep.subr.mxu0 0.0
        %265 = vmatpush1.msra.mxu0 0.0
        %266 = vmatprep.subr.mxu0 0.0
        %267 = vmatpush1.msra.mxu0 0.0
        %268 = vmatprep.subr.mxu0 0.0
        %269 = vmatpush1.msra.mxu0 0.0
        %270 = vmatprep.subr.mxu0 0.0
        %271 = vmatpush1.msra.mxu0 0.0
        %272 = vmatprep.subr.mxu0 0.0
        %273 = vmatpush1.msra.mxu0 0.0
        %274 = vmatprep.subr.mxu0 0.0
        %275 = vmatpush1.msra.mxu0 0.0
        %276 = vmatprep.subr.mxu0 0.0
        %277 = vmatpush1.msra.mxu0 0.0
        %278 = vmatprep.subr.mxu0 0.0
        %279 = vmatpush1.msra.mxu0 0.0
        %280 = vmatprep.subr.mxu0 0.0
        %281 = vmatpush1.msra.mxu0 0.0
        %282 = vmatprep.subr.mxu0 0.0
        %283 = vmatpush1.msra.mxu0 0.0
        %284 = vmatprep.subr.mxu0 0.0
        %285 = vmatpush1.msra.mxu0 0.0
        %286 = vmatprep.subr.mxu0 0.0
        %287 = vmatpush1.msra.mxu0 0.0
        %288 = vmatprep.subr.mxu0 0.0
        %289 = vmatpush1.msra.mxu0 0.0
        %290 = vmatprep.subr.mxu0 0.0
        %291 = vmatpush1.msra.mxu0 0.0
        %292 = vmatprep.subr.mxu0 0.0
        %293 = vmatpush1.msra.mxu0 0.0
        %294 = vmatprep.subr.mxu0 0.0
        %295 = vmatpush1.msra.mxu0 0.0
        %296 = vmatprep.subr.mxu0 0.0
        %297 = vmatpush1.msra.mxu0 0.0
        %298 = vmatprep.subr.mxu0 0.0
        %299 = vmatpush1.msra.mxu0 0.0
        %300 = vmatprep.subr.mxu0 0.0
        %301 = vmatpush1.msra.mxu0 0.0
        %302 = vmatprep.subr.mxu0 0.0
        %303 = vmatpush1.msra.mxu0 0.0
        %304 = vmatprep.subr.mxu0 0.0
        %305 = vmatpush1.msra.mxu0 0.0
        %306 = vmatprep.subr.mxu0 0.0
        %307 = vmatpush1.msra.mxu0 0.0
        %308 = vmatprep.subr.mxu0 0.0
        %309 = vmatpush1.msra.mxu0 0.0
        %310 = vmatprep.subr.mxu0 0.0
        %311 = vmatpush1.msra.mxu0 0.0
        %312 = vmatprep.subr.mxu0 0.0
        %313 = vmatpush1.msra.mxu0 0.0
        %314 = vmatprep.mubr.f32.mxu0 0.0
        %315 = vmatmul.mubr.f32.gmra.mrb[0].mxu0 %v248
        %v316 = vpop.f32.mrb[0].mxu0
        %v317 = vadd.f32 0.0, %v316
        %v318 = vpop.f32.mrb[0].mxu0
        %319 = vdwg.mxu0
        %v320 = vmul.f32 %v317, 0.125
        %321 = vst.msk [vmem:[%s161] sm:$0xff] %vm171, %v320
        %s322 = sand.u32 %s93, 1
        %s323 = scalar_lea.sflag [#allocation3], %s322
        %s324 = sand.u32 %s93, 1
        %s325 = smul.addr %s324, 8
        %s326 = scalar_lea.vmem [#allocation2], %s325
        // Predicated region
        $region33: #{tpu_custom_call.1} parent=31 // pred_check
          %p327 = pneg %p103
        $region34: #{tpu_custom_call.1} parent=31 // pred_check_branch
          %329 = sbr.rel (%p327) target = $region36
        $region35: #{tpu_custom_call.1} parent=31 // pred_region
          %s331 = ssub.s32 128, 128
          %332 = vsyncadd %s323, %s331
          %s333 = smul.addr %s17, 128
          %s334 = scalar_lea.hbm %s3, %s333
          %s336 = sshll.u32 %s326, 4
          %s337 = int_to_ptr.vmem [resolvable:$true] %s336
          %339 = dma.vmem_to_hbm [thread:$0]  %s337, 128, %s334, %s323
        $region36: #{tpu_custom_call.1} parent=31 // pred_fallthru
          _
      $region32: #{tpu_custom_call.1} parent=5 // pred_fallthru
        _
      %p340 = scmp.le.s32.totalorder 2, %s12
      // Predicated region
      $region37: #{tpu_custom_call.1} parent=5 // pred_check
        %p341 = pneg %p340
      $region38: #{tpu_custom_call.1} parent=5 // pred_check_branch
        %343 = sbr.rel (%p341) target = $region40
      $region39: #{tpu_custom_call.1} parent=5 // pred_region
        %s344 = ssub.s32 %s12, 2
        // Predicated region
        $region41: #{tpu_custom_call.1} parent=39 // pred_check
          %p345 = pneg %p109
        $region42: #{tpu_custom_call.1} parent=39 // pred_check_branch
          %347 = sbr.rel (%p345) target = $region44
        $region43: #{tpu_custom_call.1} parent=39 // pred_region
          %s348 = sand.u32 %s94, 1
          %s349 = scalar_lea.sflag [#allocation3], %s348
          %s350 = sand.u32 %s94, 1
          %s351 = smul.addr %s350, 8
          %s352 = scalar_lea.vmem [#allocation2], %s351
          %353 = dma.done %s349, 128
        $region44: #{tpu_custom_call.1} parent=39 // pred_fallthru
          _
      $region40: #{tpu_custom_call.1} parent=5 // pred_fallthru
        _
    $region6: #{tpu_custom_call.1} parent=1 // loop_footer
      %s16 = sadd.s32 1, %s12
    $region7: #{tpu_custom_call.1} parent=1 // loop_footer_branch
      %11 = sbr.rel target = $region3
    $region8: #{tpu_custom_call.1} parent=1 // loop_exit
      _
    %354 = vsyncpa [#allocation3], 1
    %s355 = scalar_lea.sflag [#allocation3], 1
    %356 = vsyncpa %s355, 1

</llo_original>
